<compile_context>
chip_gen: v5e
topology: v5e:2x2
jax: 0.10.0
libtpu: 0.0.40
codegen_flags: <defaults>
</compile_context>

<pallas_src>
import functools

import jax
import jax.numpy as jnp
from jax.experimental import pallas as pl
from jax.experimental.pallas import tpu as pltpu


def _patch_emb_kernel(x_ref, w_ref, pb_ref, cls_ref, o_ref, *, n):
    # x_ref:   (TB, n_pad, patch_dim)  patches (zero rows past n, if padded)
    # w_ref:   (patch_dim, dim)        linear weight (transposed vs torch)
    # pb_ref:  (n_pad, dim)            pos_embedding[1:] + bias       (f32)
    # cls_ref: (1, dim)                cls_token + pos_embedding[0]   (f32)
    # o_ref:   (TB, n + 1, dim)
    tb, n_pad, patch_dim = x_ref.shape
    dim = w_ref.shape[1]

    # Collapse (TB, n_pad) -> M: ONE resident-weight MXU matmul per grid step.
    # n_pad % 8 == 0 (wrapper guarantees it), so this merge is layout-
    # preserving for any patch grid -- no per-step relayout copy.
    x2d = x_ref[...].reshape(tb * n_pad, patch_dim)
    emb = jnp.dot(x2d, w_ref[...], preferred_element_type=jnp.float32)
    emb = emb.reshape(tb, n_pad, dim) + pb_ref[...][None, :, :]   # f32 VPU add

    # Two stores instead of concat + shifted full-block store:
    #   row 0     <- cls_token + pos[0]   (constant, no matmul needed)
    #   rows 1..n <- patch embeddings     (pad rows, if any, are dropped)
    cls = cls_ref[...]                                            # (1, dim) f32
    o_ref[:, 0:1, :] = jnp.broadcast_to(cls[None], (tb, 1, dim)).astype(o_ref.dtype)
    o_ref[:, pl.ds(1, n), :] = emb[:, :n, :].astype(o_ref.dtype)


def patch_linear_emb(img, weight_t, bias, cls_token, pos_embedding, patch_size,
                     *, batch_tile=None, mxu_dtype=None, out_dtype=jnp.float32,
                     vmem_block_budget=28 * 1024 * 1024,
                     vmem_limit_bytes=48 * 1024 * 1024):
    """Forward pass of Patch_Linear_emb (dropout=0.0 => identity).

    img:           (b, 3, H, W) float32, NCHW
    weight_t:      (patch_dim, dim)  == torch Linear weight transposed
    bias:          (dim,)
    cls_token:     (1, 1, dim)
    pos_embedding: (1, num_patches + 1, dim)
    batch_tile:    batch elements per grid step (None = auto: ~1024 M rows,
                   VMEM-budgeted, grid kept >= 2 for v7x's two TensorCores).
    mxu_dtype:     optional dtype for the dot operands only (jnp.bfloat16 is
                   recommended on v6e/v7x); accumulation / elementwise stay f32.
    out_dtype:     output dtype (bf16 halves writeback if downstream accepts).
    """
    b, c, H, W = img.shape
    p = patch_size
    h, w = H // p, W // p
    n = h * w
    patch_dim = c * p * p
    dim = weight_t.shape[1]

    # einops: 'b c (h p1) (w p2) -> b (h w) (p1 p2 c)'   (c is the fastest axis)
    # TODO(synk): fold this rearrange into the kernel DMA (see header note).
    x = img.reshape(b, c, h, p, w, p)
    x = jnp.transpose(x, (0, 2, 4, 3, 5, 1)).reshape(b, n, patch_dim)

    # Fold bias / pos / cls outside the kernel (one-time O(n*dim) precompute).
    pos2d = pos_embedding.reshape(n + 1, dim)
    pos_bias = (pos2d[1:, :] + bias.reshape(1, dim)).astype(jnp.float32)
    cls_row = (cls_token.reshape(1, dim) + pos2d[0:1, :]).astype(jnp.float32)

    if mxu_dtype is not None:                 # bf16 dot operands on v6e / v7x
        x = x.astype(mxu_dtype)
        weight_t = weight_t.astype(mxu_dtype)

    # Pad the patch axis to a sublane multiple so the in-kernel merge never
    # relayouts (n=196 etc.).  Zero rows; dropped before the output store.
    n_pad = -(-n // 8) * 8
    if n_pad != n:
        x = jnp.pad(x, ((0, 0), (0, n_pad - n), (0, 0)))
        pos_bias = jnp.pad(pos_bias, ((0, n_pad - n), (0, 0)))

    x_bytes = jnp.dtype(x.dtype).itemsize
    out_bytes = jnp.dtype(out_dtype).itemsize

    def blocks_bytes(t):
        # Conservative: count every block double-buffered.
        # (Constant weight/pos/cls blocks could use pl.Buffered(1) to reclaim
        #  their second buffer; left default pending profiling.)
        x_blk = t * n_pad * patch_dim * x_bytes
        o_blk = t * (n + 1) * dim * out_bytes
        w_blk = patch_dim * dim * x_bytes
        pb_blk = n_pad * dim * 4
        cls_blk = dim * 4
        return 2 * (x_blk + o_blk + w_blk + pb_blk + cls_blk)

    if batch_tile is None:
        # ~1024 M rows per step, VMEM-budgeted; keep grid >= 2 so both v7x
        # TensorCores get work (negligible cost on single-TC v5e/v6e: this op
        # is HBM-bound and per-step overhead is ~0.35 us).
        batch_tile = max(1, min(b, 1024 // max(n_pad, 1)))
        if b >= 2:
            batch_tile = max(1, min(batch_tile, b // 2))
        while batch_tile > 1 and blocks_bytes(batch_tile) > vmem_block_budget:
            batch_tile -= 1
    batch_tile = max(1, min(batch_tile, b))
    while b % batch_tile:
        batch_tile -= 1
    grid = (b // batch_tile,)

    cost = pl.CostEstimate(
        flops=2 * b * n * patch_dim * dim,
        transcendentals=0,
        bytes_accessed=(x.size * x_bytes
                        + weight_t.size * x_bytes
                        + pos_bias.size * 4 + cls_row.size * 4
                        + b * (n + 1) * dim * out_bytes))

    kernel = functools.partial(_patch_emb_kernel, n=n)

    out = pl.pallas_call(
        kernel,
        out_shape=jax.ShapeDtypeStruct((b, n + 1, dim), out_dtype),
        grid_spec=pl.GridSpec(
            grid=grid,
            in_specs=[
                pl.BlockSpec((batch_tile, n_pad, patch_dim), lambda i: (i, 0, 0)),
                pl.BlockSpec((patch_dim, dim), lambda i: (0, 0)),
                pl.BlockSpec((n_pad, dim), lambda i: (0, 0)),
                pl.BlockSpec((1, dim), lambda i: (0, 0)),
            ],
            out_specs=pl.BlockSpec((batch_tile, n + 1, dim),
                                   lambda i: (i, 0, 0)),
        ),
        compiler_params=pltpu.CompilerParams(
            dimension_semantics=("parallel",),
            vmem_limit_bytes=vmem_limit_bytes),
        cost_estimate=cost,
    )(x, weight_t, pos_bias, cls_row)
    return out


def _reference(img, weight_t, bias, cls_token, pos_embedding, patch_size):
    b, c, H, W = img.shape
    p = patch_size
    h, w = H // p, W // p
    n = h * w
    x = img.reshape(b, c, h, p, w, p)
    x = jnp.transpose(x, (0, 2, 4, 3, 5, 1)).reshape(b, n, c * p * p)
    x = x @ weight_t + bias
    cls = jnp.broadcast_to(cls_token, (b, 1, weight_t.shape[1]))
    x = jnp.concatenate([cls, x], axis=1)
    return x + pos_embedding[:, : n + 1]


if __name__ == "__main__":
    # Small shapes consistent with the module:
    #   image_size=16, patch_size=4 -> num_patches = 16, patch_dim = 3*16 = 48
    #   dim = 32, batch = 2, dropout = 0.0
    batch, channels, image_size, patch_size, dim = 2, 3, 16, 4, 32
    num_patches = (image_size // patch_size) ** 2
    patch_dim = channels * patch_size ** 2

    key = jax.random.PRNGKey(0)
    k_img, k_w, k_b, k_cls, k_pos = jax.random.split(key, 5)

    img = jax.random.normal(k_img, (batch, channels, image_size, image_size),
                            dtype=jnp.float32)
    # torch nn.Linear(patch_dim, dim): weight (dim, patch_dim); stored transposed.
    weight_t = (jax.random.normal(k_w, (patch_dim, dim), dtype=jnp.float32)
                * (1.0 / jnp.sqrt(patch_dim)))
    bias = jax.random.normal(k_b, (dim,), dtype=jnp.float32) * 0.01
    cls_token = jax.random.normal(k_cls, (1, 1, dim), dtype=jnp.float32)
    pos_embedding = jax.random.normal(k_pos, (1, num_patches + 1, dim),
                                      dtype=jnp.float32)

    ref = _reference(img, weight_t, bias, cls_token, pos_embedding, patch_size)

    # Default f32 path: tight numerical check.
    out = patch_linear_emb(img, weight_t, bias, cls_token, pos_embedding,
                           patch_size)
    out = jax.block_until_ready(out)
    assert out.shape == (batch, num_patches + 1, dim), out.shape
    assert jnp.allclose(out, ref, atol=1e-5, rtol=1e-5), "f32 mismatch vs reference"

    # bf16-operand path (the recommended setting on v6e/v7x): loose tolerance,
    # expected precision loss only.
    out_bf16 = patch_linear_emb(img, weight_t, bias, cls_token, pos_embedding,
                                patch_size, mxu_dtype=jnp.bfloat16)
    out_bf16 = jax.block_until_ready(out_bf16)
    assert out_bf16.shape == (batch, num_patches + 1, dim), out_bf16.shape
    assert jnp.allclose(out_bf16, ref, atol=0.15, rtol=0.05), "bf16 path mismatch"

    print("KERNEL_OK")
</pallas_src>

<mosaic_0001>
module attributes {stable_mosaic.version = 11 : i64} {
  func.func @_patch_emb_kernel(%arg0: i32, %arg1: memref<1x16x48xf32, #tpu.memory_space<vmem>>, %arg2: memref<48x32xf32, #tpu.memory_space<vmem>>, %arg3: memref<16x32xf32, #tpu.memory_space<vmem>>, %arg4: memref<1x32xf32, #tpu.memory_space<vmem>>, %arg5: memref<1x17x32xf32, #tpu.memory_space<vmem>>) attributes {dimension_semantics = [#tpu.dimension_semantics<parallel>], iteration_bounds = array<i64: 2>, scalar_prefetch = 0 : i64, scratch_operands = 0 : i64, tpu.core_type = #tpu.core_type<tc>, window_params = [{transform_indices = @transform_0, window_bounds = array<i64: 1, 16, 48>}, {pipeline_mode = #tpu.pipeline_mode<synchronous>, transform_indices = @transform_1, window_bounds = array<i64: 48, 32>}, {pipeline_mode = #tpu.pipeline_mode<synchronous>, transform_indices = @transform_2, window_bounds = array<i64: 16, 32>}, {pipeline_mode = #tpu.pipeline_mode<synchronous>, transform_indices = @transform_3, window_bounds = array<i64: 1, 32>}, {transform_indices = @transform_4, window_bounds = array<i64: 1, 17, 32>}]} {
    %c0 = arith.constant 0 : index
    %c0_0 = arith.constant 0 : index
    %c0_1 = arith.constant 0 : index
    %0 = vector.load %arg1[%c0, %c0_0, %c0_1] : memref<1x16x48xf32, #tpu.memory_space<vmem>>, vector<1x16x48xf32>
    %1 = vector.shape_cast %0 : vector<1x16x48xf32> to vector<16x48xf32>
    %c0_2 = arith.constant 0 : index
    %c0_3 = arith.constant 0 : index
    %2 = vector.load %arg2[%c0_2, %c0_3] : memref<48x32xf32, #tpu.memory_space<vmem>>, vector<48x32xf32>
    %cst = arith.constant dense<0.000000e+00> : vector<16x32xf32>
    %3 = tpu.matmul %1, %2, %cst {dimension_numbers = #tpu.dot_dimension_numbers<[1], [0], [0], [1], [0, 0, 1, 1], [], []>} : vector<16x48xf32>, vector<48x32xf32>, vector<16x32xf32> -> vector<16x32xf32>
    %4 = vector.shape_cast %3 : vector<16x32xf32> to vector<1x16x32xf32>
    %c0_4 = arith.constant 0 : index
    %c0_5 = arith.constant 0 : index
    %5 = vector.load %arg3[%c0_4, %c0_5] : memref<16x32xf32, #tpu.memory_space<vmem>>, vector<16x32xf32>
    %6 = vector.shape_cast %5 : vector<16x32xf32> to vector<1x16x32xf32>
    %7 = arith.addf %4, %6 : vector<1x16x32xf32>
    %c0_6 = arith.constant 0 : index
    %c0_7 = arith.constant 0 : index
    %8 = vector.load %arg4[%c0_6, %c0_7] : memref<1x32xf32, #tpu.memory_space<vmem>>, vector<1x32xf32>
    %9 = vector.shape_cast %8 : vector<1x32xf32> to vector<1x1x32xf32>
    %c0_8 = arith.constant 0 : index
    %c0_9 = arith.constant 0 : index
    %c0_10 = arith.constant 0 : index
    %10 = vector.load %arg5[%c0_8, %c0_9, %c0_10] : memref<1x17x32xf32, #tpu.memory_space<vmem>>, vector<1x1x32xf32>
    tpu.vector_store %arg5[%c0_8, %c0_9, %c0_10], %9 {strides = array<i32>} : memref<1x17x32xf32, #tpu.memory_space<vmem>>, vector<1x1x32xf32>,
    %c0_11 = arith.constant 0 : index
    %c1 = arith.constant 1 : index
    %c0_12 = arith.constant 0 : index
    %11 = vector.load %arg5[%c0_11, %c1, %c0_12] : memref<1x17x32xf32, #tpu.memory_space<vmem>>, vector<1x16x32xf32>
    tpu.vector_store %arg5[%c0_11, %c1, %c0_12], %7 {strides = array<i32>} : memref<1x17x32xf32, #tpu.memory_space<vmem>>, vector<1x16x32xf32>,
    return
  }
  func.func @transform_0(%arg0: i32) -> (i32, i32, i32) {
    %c0_i32 = arith.constant 0 : i32
    %c0_i32_0 = arith.constant 0 : i32
    %c0_i32_1 = arith.constant 0 : i32
    return %arg0, %c0_i32, %c0_i32_0 : i32, i32, i32
  }
  func.func @transform_1(%arg0: i32) -> (i32, i32) {
    %c0_i32 = arith.constant 0 : i32
    %c0_i32_0 = arith.constant 0 : i32
    %c0_i32_1 = arith.constant 0 : i32
    return %c0_i32, %c0_i32_0 : i32, i32
  }
  func.func @transform_2(%arg0: i32) -> (i32, i32) {
    %c0_i32 = arith.constant 0 : i32
    %c0_i32_0 = arith.constant 0 : i32
    %c0_i32_1 = arith.constant 0 : i32
    return %c0_i32, %c0_i32_0 : i32, i32
  }
  func.func @transform_3(%arg0: i32) -> (i32, i32) {
    %c0_i32 = arith.constant 0 : i32
    %c0_i32_0 = arith.constant 0 : i32
    %c0_i32_1 = arith.constant 0 : i32
    return %c0_i32, %c0_i32_0 : i32, i32
  }
  func.func @transform_4(%arg0: i32) -> (i32, i32, i32) {
    %c0_i32 = arith.constant 0 : i32
    %c0_i32_0 = arith.constant 0 : i32
    %c0_i32_1 = arith.constant 0 : i32
    return %arg0, %c0_i32, %c0_i32_0 : i32, i32, i32
  }
}

</mosaic_0001>

<llo_original>
// kernel: tpu_custom_call.1
$region0: #{tpu_custom_call.1}
  #allocation0 [shape = 'u32[]', space=smem, size = 0x4, offset = 0x4, fixed_abs, tag = 'smem constant byte address 0x4 - core index']
  #allocation1 [shape = 'u32[72,128]{1,0:T(1,128)}', space=vmem, size = 0x9000, scoped, tag = 'internal scratch']
  %s0 = inlined_call_operand.vmem [shape: f32[2,16,48], index: 0, kind: input, shape index: {}]
  %s1 = inlined_call_operand.vmem [shape: f32[48,32], index: 1, kind: input, shape index: {}]
  %s2 = inlined_call_operand.vmem [shape: f32[16,32], index: 2, kind: input, shape index: {}]
  %s3 = inlined_call_operand.vmem [shape: f32[1,32], index: 3, kind: input, shape index: {}]
  %s4 = inlined_call_operand.vmem [shape: f32[2,17,32], index: 4, kind: output, shape index: {}]
  %s5 = sld [smem:[#allocation0]]
  $region49: #{tpu_custom_call.1} parent=0
    _
  %s7 = ssub.s32 1, %s5
  %s8 = scalar_select 0, %s7, %s5
  loop: start=0, step=1, limit=4
  $region2: #{tpu_custom_call.1} parent=0 // loop_pre_header
    _
  $region3: #{tpu_custom_call.1} parent=0 // loop_header
    %s10 = sphi 0, %s14
    %p11 = scmp.ge.s32.totalorder %s10, 4
    %s20 = sphi 0, %s22
    %s23 = sphi 0, %s20
    %s24 = sphi 0, %s23
    %s40 = sphi 0, %s24
    %s44 = sphi 0, %s44
    %s46 = sphi 0, %s44
    %s47 = sphi 0, %s46
    %s61 = sphi 0, %s47
    %s65 = sphi 0, %s65
    %s67 = sphi 0, %s65
    %s68 = sphi 0, %s67
    %s82 = sphi 0, %s68
    %s86 = sphi 0, %s86
    %s88 = sphi 0, %s86
    %s89 = sphi 0, %s88
    %s103 = sphi 0, %s89
    %s109 = sphi 0, %s111
    %s112 = sphi 0, %s109
    %s113 = sphi 0, %s112
    %s129 = sphi 0, %s113
  $region4: #{tpu_custom_call.1} parent=0 // loop_header_branch
    %13 = sbr.rel (%p11) target = $region8
  $region5: #{tpu_custom_call.1} parent=0 // loop_body
    %s15 = ssub.s32 %s10, 1
    %s16 = ssub.s32 %s10, 2
    %s17 = sadd.s32 %s10, 1
    %s18 = ssub.s32 %s10, %s17
    %p19 = scmp.eq.s32.totalorder %s18, 0
    %s21 = sadd.s32 %s20, 1
    %s22 = scalar_select %p19, %s20, %s21
    %p25 = pneg %p19
    %p26 = scmp.eq.s32.totalorder %s10, 1
    %p27 = por %p25, %p26
    %p28 = scmp.ne.s32.totalorder %s20, %s23
    %p29 = scmp.eq.s32.totalorder %s10, 0
    %p30 = por %p28, %p29
    %p31 = scmp.ne.s32.totalorder %s20, %s23
    %p32 = scmp.eq.s32.totalorder %s15, 1
    %p33 = por %p31, %p32
    %p34 = scmp.ne.s32.totalorder %s23, %s24
    %p35 = scmp.eq.s32.totalorder %s15, 0
    %p36 = por %p34, %p35
    %p37 = scmp.ne.s32.totalorder %s23, %s24
    %p38 = scmp.eq.s32.totalorder %s16, 1
    %p39 = por %p37, %p38
    %p41 = scmp.ne.s32.totalorder %s24, %s40
    %p42 = scmp.eq.s32.totalorder %s16, 0
    %p43 = por %p41, %p42
    %s45 = sadd.s32 %s44, 1
    %p48 = scmp.eq.s32.totalorder %s10, 1
    %p49 = scmp.ne.s32.totalorder %s44, %s46
    %p50 = scmp.eq.s32.totalorder %s10, 0
    %p51 = por %p49, %p50
    %p52 = scmp.ne.s32.totalorder %s44, %s46
    %p53 = scmp.eq.s32.totalorder %s15, 1
    %p54 = por %p52, %p53
    %p55 = scmp.ne.s32.totalorder %s46, %s47
    %p56 = scmp.eq.s32.totalorder %s15, 0
    %p57 = por %p55, %p56
    %p58 = scmp.ne.s32.totalorder %s46, %s47
    %p59 = scmp.eq.s32.totalorder %s16, 1
    %p60 = por %p58, %p59
    %p62 = scmp.ne.s32.totalorder %s47, %s61
    %p63 = scmp.eq.s32.totalorder %s16, 0
    %p64 = por %p62, %p63
    %s66 = sadd.s32 %s65, 1
    %p69 = scmp.eq.s32.totalorder %s10, 1
    %p70 = scmp.ne.s32.totalorder %s65, %s67
    %p71 = scmp.eq.s32.totalorder %s10, 0
    %p72 = por %p70, %p71
    %p73 = scmp.ne.s32.totalorder %s65, %s67
    %p74 = scmp.eq.s32.totalorder %s15, 1
    %p75 = por %p73, %p74
    %p76 = scmp.ne.s32.totalorder %s67, %s68
    %p77 = scmp.eq.s32.totalorder %s15, 0
    %p78 = por %p76, %p77
    %p79 = scmp.ne.s32.totalorder %s67, %s68
    %p80 = scmp.eq.s32.totalorder %s16, 1
    %p81 = por %p79, %p80
    %p83 = scmp.ne.s32.totalorder %s68, %s82
    %p84 = scmp.eq.s32.totalorder %s16, 0
    %p85 = por %p83, %p84
    %s87 = sadd.s32 %s86, 1
    %p90 = scmp.eq.s32.totalorder %s10, 1
    %p91 = scmp.ne.s32.totalorder %s86, %s88
    %p92 = scmp.eq.s32.totalorder %s10, 0
    %p93 = por %p91, %p92
    %p94 = scmp.ne.s32.totalorder %s86, %s88
    %p95 = scmp.eq.s32.totalorder %s15, 1
    %p96 = por %p94, %p95
    %p97 = scmp.ne.s32.totalorder %s88, %s89
    %p98 = scmp.eq.s32.totalorder %s15, 0
    %p99 = por %p97, %p98
    %p100 = scmp.ne.s32.totalorder %s88, %s89
    %p101 = scmp.eq.s32.totalorder %s16, 1
    %p102 = por %p100, %p101
    %p104 = scmp.ne.s32.totalorder %s89, %s103
    %p105 = scmp.eq.s32.totalorder %s16, 0
    %p106 = por %p104, %p105
    %s107 = ssub.s32 %s10, %s17
    %p108 = scmp.eq.s32.totalorder %s107, 0
    %s110 = sadd.s32 %s109, 1
    %s111 = scalar_select %p108, %s109, %s110
    %p114 = pneg %p108
    %p115 = scmp.eq.s32.totalorder %s10, 1
    %p116 = por %p114, %p115
    %p117 = scmp.ne.s32.totalorder %s109, %s112
    %p118 = scmp.eq.s32.totalorder %s10, 0
    %p119 = por %p117, %p118
    %p120 = scmp.ne.s32.totalorder %s109, %s112
    %p121 = scmp.eq.s32.totalorder %s15, 1
    %p122 = por %p120, %p121
    %p123 = scmp.ne.s32.totalorder %s112, %s113
    %p124 = scmp.eq.s32.totalorder %s15, 0
    %p125 = por %p123, %p124
    %p126 = scmp.ne.s32.totalorder %s112, %s113
    %p127 = scmp.eq.s32.totalorder %s16, 1
    %p128 = por %p126, %p127
    %p130 = scmp.ne.s32.totalorder %s113, %s129
    %p131 = scmp.eq.s32.totalorder %s16, 0
    %p132 = por %p130, %p131
    %p133 = scmp.le.s32.totalorder 1, %s10
    %p134 = scmp.lt.s32.totalorder %s10, 3
    %p135 = pnand %p133, %p134
    %p136 = pneg %p135
    // Predicated region
    $region9: #{tpu_custom_call.1} parent=5 // pred_check
      _
    $region10: #{tpu_custom_call.1} parent=5 // pred_check_branch
      %138 = sbr.rel (%p135) target = $region12
    $region11: #{tpu_custom_call.1} parent=5 // pred_region
      %s139 = ssub.s32 %s10, 1
      // Predicated region
      $region13: #{tpu_custom_call.1} parent=11 // pred_check
        %p140 = pneg %p57
      $region14: #{tpu_custom_call.1} parent=11 // pred_check_branch
        %142 = sbr.rel (%p140) target = $region16
      $region15: #{tpu_custom_call.1} parent=11 // pred_region
        _
      $region16: #{tpu_custom_call.1} parent=11 // pred_fallthru
        _
      // Predicated region
      $region17: #{tpu_custom_call.1} parent=11 // pred_check
        %p143 = pneg %p78
      $region18: #{tpu_custom_call.1} parent=11 // pred_check_branch
        %145 = sbr.rel (%p143) target = $region20
      $region19: #{tpu_custom_call.1} parent=11 // pred_region
        _
      $region20: #{tpu_custom_call.1} parent=11 // pred_fallthru
        _
      // Predicated region
      $region21: #{tpu_custom_call.1} parent=11 // pred_check
        %p146 = pneg %p99
      $region22: #{tpu_custom_call.1} parent=11 // pred_check_branch
        %148 = sbr.rel (%p146) target = $region24
      $region23: #{tpu_custom_call.1} parent=11 // pred_region
        _
      $region24: #{tpu_custom_call.1} parent=11 // pred_fallthru
        _
    $region12: #{tpu_custom_call.1} parent=5 // pred_fallthru
      _
    %p149 = scmp.lt.s32.totalorder %s10, 2
    // Predicated region
    $region25: #{tpu_custom_call.1} parent=5 // pred_check
      %p150 = pneg %p149
    $region26: #{tpu_custom_call.1} parent=5 // pred_check_branch
      %152 = sbr.rel (%p150) target = $region28
    $region27: #{tpu_custom_call.1} parent=5 // pred_region
      // Predicated region
      $region29: #{tpu_custom_call.1} parent=27 // pred_check
        %p153 = pneg %p30
      $region30: #{tpu_custom_call.1} parent=27 // pred_check_branch
        %155 = sbr.rel (%p153) target = $region32
      $region31: #{tpu_custom_call.1} parent=27 // pred_region
        %p156 = scmp.lt.s32.totalorder %s10, 1
        %s157 = scalar_select %p156, %s10, 1
        %s158 = smul.addr %s157, 2
        %s159 = smul.addr %s158, 8
        %s160 = scalar_lea.vmem %s0, %s159
      $region32: #{tpu_custom_call.1} parent=27 // pred_fallthru
        _
    $region28: #{tpu_custom_call.1} parent=5 // pred_fallthru
      _
    %p161 = scmp.le.s32.totalorder 1, %s10
    %p162 = scmp.lt.s32.totalorder %s10, 3
    %p163 = pnand %p161, %p162
    %p164 = pneg %p163
    // Predicated region
    $region33: #{tpu_custom_call.1} parent=5 // pred_check
      _
    $region34: #{tpu_custom_call.1} parent=5 // pred_check_branch
      %166 = sbr.rel (%p163) target = $region36
    $region35: #{tpu_custom_call.1} parent=5 // pred_region
      %s167 = ssub.s32 %s10, 1
      %p168 = scmp.lt.s32.totalorder %s15, 1
      %s169 = scalar_select %p168, %s15, 1
      %s170 = smul.addr %s169, 2
      %s171 = smul.addr %s170, 8
      %s172 = scalar_lea.vmem %s0, %s171
      %p173 = pneg %p36
      %p174 = pneg %p33
      %p175 = pneg %p57
      %p176 = pneg %p54
      %p177 = pneg %p78
      %p178 = pneg %p75
      %p179 = pneg %p99
      %p180 = pneg %p96
      %p181 = pneg %p125
      %p182 = pneg %p122
      %p183 = scmp.lt.s32.totalorder %s15, 1
      %s184 = scalar_select %p183, %s15, 1
      %s185 = smul.addr %s184, 3
      %s186 = smul.addr %s185, 8
      %s187 = scalar_lea.vmem %s4, %s186
      %p188 = scmp.lt.s32.totalorder %s15, 1
      %s189 = scalar_select %p188, %s15, 1
      %s190 = smul.addr %s189, 2
      %s191 = smul.addr %s190, 8
      %s192 = scalar_lea.vmem %s0, %s191
      %p193 = scmp.lt.s32.totalorder %s15, 1
      %s194 = scalar_select %p193, %s15, 1
      %s195 = smul.addr %s194, 3
      %s196 = smul.addr %s195, 8
      %s197 = scalar_lea.vmem %s4, %s196
      %v198 = vld [vmem:[%s192] sm:$0xff]
      %v199 = vld [vmem:[%s192 + $0x8] sm:$0xff]
      %v200 = vld [vmem:[%s1] sm:$0xff]
      %v201 = vld [vmem:[%s1 + $0x8] sm:$0xff]
      %v202 = vld [vmem:[%s1 + $0x10] sm:$0xff]
      %v203 = vld [vmem:[%s1 + $0x18] sm:$0xff]
      %v204 = vld [vmem:[%s1 + $0x20] sm:$0xff]
      %v205 = vld [vmem:[%s1 + $0x28] sm:$0xff]
      %vm206 = vcmask 392192
      %v208 = vsel %vm206, %v198, 0
      %v211 = vsel %vm206, %v199, 0
      %213 = vmatpush.msra.mxu0 0.0
      %214 = vmatpush.msra.mxu0 0.0
      %215 = vmatpush.msra.mxu0 0.0
      %216 = vmatpush.msra.mxu0 0.0
      %217 = vmatpush.msra.mxu0 0.0
      %218 = vmatpush.msra.mxu0 0.0
      %219 = vmatpush.msra.mxu0 0.0
      %220 = vmatpush.msra.mxu0 0.0
      %221 = vmatpush.msra.mxu0 0.0
      %222 = vmatpush.msra.mxu0 0.0
      %223 = vmatpush.msra.mxu0 %v205
      %224 = vmatpush.msra.mxu0 %v204
      %225 = vmatpush.msra.mxu0 %v203
      %226 = vmatpush.msra.mxu0 %v202
      %227 = vmatpush.msra.mxu0 %v201
      %228 = vmatpush.msra.mxu0 %v200
      %229 = vmatmul.f32.gmra.mxu0 %v208
      %v230 = vpop.f32.mrf.mxu0
      %v231 = vadd.f32 0.0, %v230
      %232 = vmatmul.f32.gmra.mxu0 %v211
      %v233 = vpop.f32.mrf.mxu0
      %v234 = vadd.f32 0.0, %v233
      %235 = vdwg.mxu0
      %v236 = vld [vmem:[%s2] sm:$0xff]
      %v237 = vld [vmem:[%s2 + $0x8] sm:$0xff]
      %v238 = vadd.f32 %v231, %v236
      %v239 = vadd.f32 %v234, %v237
      %v240 = vld [vmem:[%s3] sm:$0x1]
      %vm241 = vcmask 253952
      %242 = vst.msk [vmem:[%s197] sm:$0x1] %vm241, %v240
      %vm243 = vcmask 261120
      %244 = vst.msk [vmem:[%s197 + $0x1] sm:$0xff] %vm243, %v238
      %245 = vst.msk [vmem:[%s197 + $0x9] sm:$0xff] %vm243, %v239
      %p246 = scmp.lt.s32.totalorder %s15, 1
      %s247 = scalar_select %p246, %s15, 1
      %s248 = smul.addr %s247, 3
      %s249 = smul.addr %s248, 8
      %s250 = scalar_lea.vmem %s4, %s249
      // Predicated region
      $region37: #{tpu_custom_call.1} parent=35 // pred_check
        %p251 = pneg %p122
      $region38: #{tpu_custom_call.1} parent=35 // pred_check_branch
        %253 = sbr.rel (%p251) target = $region40
      $region39: #{tpu_custom_call.1} parent=35 // pred_region
        _
      $region40: #{tpu_custom_call.1} parent=35 // pred_fallthru
        _
    $region36: #{tpu_custom_call.1} parent=5 // pred_fallthru
      _
    %p254 = scmp.le.s32.totalorder 2, %s10
    // Predicated region
    $region41: #{tpu_custom_call.1} parent=5 // pred_check
      %p255 = pneg %p254
    $region42: #{tpu_custom_call.1} parent=5 // pred_check_branch
      %257 = sbr.rel (%p255) target = $region44
    $region43: #{tpu_custom_call.1} parent=5 // pred_region
      %s258 = ssub.s32 %s10, 2
      // Predicated region
      $region45: #{tpu_custom_call.1} parent=43 // pred_check
        %p259 = pneg %p128
      $region46: #{tpu_custom_call.1} parent=43 // pred_check_branch
        %261 = sbr.rel (%p259) target = $region48
      $region47: #{tpu_custom_call.1} parent=43 // pred_region
        %p262 = scmp.lt.s32.totalorder %s16, 1
        %s263 = scalar_select %p262, %s16, 1
        %s264 = smul.addr %s263, 3
        %s265 = smul.addr %s264, 8
        %s266 = scalar_lea.vmem %s4, %s265
      $region48: #{tpu_custom_call.1} parent=43 // pred_fallthru
        _
    $region44: #{tpu_custom_call.1} parent=5 // pred_fallthru
      _
  $region6: #{tpu_custom_call.1} parent=0 // loop_footer
    %s14 = sadd.s32 1, %s10
  $region7: #{tpu_custom_call.1} parent=0 // loop_footer_branch
    %9 = sbr.rel target = $region3
  $region8: #{tpu_custom_call.1} parent=0 // loop_exit
    _

</llo_original>
